<compile_context>
chip_gen: v6e
topology: v6e:2x2x1
jax: 0.10.0
libtpu: 0.0.40
codegen_flags: <defaults>
</compile_context>

<pallas_src>
import functools

import jax
import jax.numpy as jnp
from jax import lax
from jax.experimental import pallas as pl
from jax.experimental.pallas import tpu as pltpu


def _cwfc_kernel(x_ref, w_ref, b_ref, o_ref):
    """x_ref: (N, C, X), w_ref: (C, O, X), b_ref: (C, O), o_ref: (N, C*O)."""
    C, O, _ = w_ref.shape                      # static shapes
    b = b_ref[...]                             # (C, O), loaded once

    outs = []
    for c in range(C):                         # unrolled: C is small and static
        xc = x_ref[:, c, :]                    # (N, X)
        wc = w_ref[c]                          # (O, X)
        # (N, X) contracted with (O, X) on X -> (N, O); no explicit transpose.
        y = lax.dot_general(
            xc, wc,
            dimension_numbers=(((1,), (1,)), ((), ())),
            preferred_element_type=jnp.float32)
        y = y + b[c][None, :]                  # bias broadcast over N
        outs.append(jax.nn.sigmoid(y))

    # One lane-dense (N, C*O) store instead of C masked 32-lane stores.
    o_ref[...] = jnp.concatenate(outs, axis=-1).astype(o_ref.dtype)


@functools.partial(jax.jit, static_argnames=("sort",))
def channel_wise_fc2d(x_nchw, weight, bias, *, sort=False):
    """x_nchw: (N, C, H, W); weight: (C, O, X); bias: (C, O) with X = H*W.

    Returns (N, C, O) = sigmoid(per-channel Linear(x.view(N, C, -1))).
    """
    N, C, H, W = x_nchw.shape
    X = H * W
    O = weight.shape[1]

    # Free contiguous view; no transpose, no extra HBM pass.
    x = x_nchw.reshape(N, C, X)

    if sort:
        # Per-channel descending sort along X before the FC (JAX glue; the hot
        # matmul path stays in the kernel).
        x = jnp.sort(x, axis=-1, descending=True)

    out_flat = pl.pallas_call(
        _cwfc_kernel,
        out_shape=jax.ShapeDtypeStruct((N, C * O), x_nchw.dtype),
        # Whole arrays resident in VMEM for the single kernel invocation.
        in_specs=[
            pl.BlockSpec(memory_space=pltpu.MemorySpace.VMEM),
            pl.BlockSpec(memory_space=pltpu.MemorySpace.VMEM),
            pl.BlockSpec(memory_space=pltpu.MemorySpace.VMEM),
        ],
        out_specs=pl.BlockSpec(memory_space=pltpu.MemorySpace.VMEM),
    )(x, weight, bias)

    # Free contiguous view back to (N, C, O).
    return out_flat.reshape(N, C, O)


def _init_params(key, in_channels, in_features, out_features, dtype=jnp.float32):
    """Deterministic init mimicking nn.Linear's uniform(-1/sqrt(in), 1/sqrt(in))."""
    kw, kb = jax.random.split(key)
    bound = 1.0 / jnp.sqrt(jnp.asarray(in_features, dtype))
    weight = jax.random.uniform(
        kw, (in_channels, out_features, in_features), dtype,
        minval=-bound, maxval=bound)
    bias = jax.random.uniform(
        kb, (in_channels, out_features), dtype, minval=-bound, maxval=bound)
    return weight, bias


if __name__ == "__main__":
    # config: in_channels=4, in_features=H*W=256, out_features=32,
    #         use_bias=True, activation='sig', sort=False
    N, C, H, W = 2, 4, 16, 16
    O = 32
    X = H * W

    key = jax.random.PRNGKey(0)
    kx, kp = jax.random.split(key)
    x = jax.random.normal(kx, (N, C, H, W), jnp.float32)
    weight, bias = _init_params(kp, C, X, O)

    # sort=False path (module default config).
    y = channel_wise_fc2d(x, weight, bias, sort=False)
    jax.block_until_ready(y)

    x_flat = x.reshape(N, C, X)
    ref = jax.nn.sigmoid(
        jnp.einsum("ncx,cox->nco", x_flat, weight) + bias[None, :, :])
    assert y.shape == (N, C, O)
    assert jnp.allclose(y, ref, atol=1e-5, rtol=1e-5)

    # sort=True path.
    y_s = channel_wise_fc2d(x, weight, bias, sort=True)
    jax.block_until_ready(y_s)
    x_sorted = jnp.sort(x_flat, axis=-1, descending=True)
    ref_s = jax.nn.sigmoid(
        jnp.einsum("ncx,cox->nco", x_sorted, weight) + bias[None, :, :])
    assert jnp.allclose(y_s, ref_s, atol=1e-5, rtol=1e-5)

    print("KERNEL_OK")
</pallas_src>

<mosaic_0001>
module attributes {stable_mosaic.version = 11 : i64} {
  func.func @_cwfc_kernel(%arg0: memref<2x4x256xf32, #tpu.memory_space<vmem>>, %arg1: memref<4x32x256xf32, #tpu.memory_space<vmem>>, %arg2: memref<4x32xf32, #tpu.memory_space<vmem>>, %arg3: memref<2x128xf32, #tpu.memory_space<vmem>>) attributes {dimension_semantics = [], scalar_prefetch = 0 : i64, scratch_operands = 0 : i64, tpu.core_type = #tpu.core_type<tc>} {
    %c0 = arith.constant 0 : index
    %c0_0 = arith.constant 0 : index
    %0 = vector.load %arg2[%c0, %c0_0] : memref<4x32xf32, #tpu.memory_space<vmem>>, vector<4x32xf32>
    %c0_1 = arith.constant 0 : index
    %c0_2 = arith.constant 0 : index
    %c0_3 = arith.constant 0 : index
    %1 = vector.load %arg0[%c0_1, %c0_2, %c0_3] : memref<2x4x256xf32, #tpu.memory_space<vmem>>, vector<2x1x256xf32>
    %2 = vector.shape_cast %1 : vector<2x1x256xf32> to vector<2x256xf32>
    %c0_4 = arith.constant 0 : index
    %c0_5 = arith.constant 0 : index
    %c0_6 = arith.constant 0 : index
    %3 = vector.load %arg1[%c0_4, %c0_5, %c0_6] : memref<4x32x256xf32, #tpu.memory_space<vmem>>, vector<1x32x256xf32>
    %4 = vector.shape_cast %3 : vector<1x32x256xf32> to vector<32x256xf32>
    %cst = arith.constant dense<0.000000e+00> : vector<2x32xf32>
    %5 = tpu.matmul %2, %4, %cst {dimension_numbers = #tpu.dot_dimension_numbers<[1], [1], [0], [0], [0, 0, 1, 0], [], []>} : vector<2x256xf32>, vector<32x256xf32>, vector<2x32xf32> -> vector<2x32xf32>
    %6 = vector.extract_strided_slice %0 {offsets = [0, 0], sizes = [1, 32], strides = [1, 1]} : vector<4x32xf32> to vector<1x32xf32>
    %7 = vector.shape_cast %6 : vector<1x32xf32> to vector<32xf32>
    %8 = vector.shape_cast %7 : vector<32xf32> to vector<1x32xf32>
    %9 = vector.broadcast %8 : vector<1x32xf32> to vector<2x32xf32>
    %10 = arith.addf %5, %9 : vector<2x32xf32>
    %11 = arith.negf %10 : vector<2x32xf32>
    %12 = math.exp %11 : vector<2x32xf32>
    %cst_7 = arith.constant 1.000000e+00 : f32
    %13 = vector.broadcast %cst_7 : f32 to vector<2x32xf32>
    %14 = arith.addf %13, %12 : vector<2x32xf32>
    %15 = arith.divf %13, %14 : vector<2x32xf32>
    %c0_8 = arith.constant 0 : index
    %c1 = arith.constant 1 : index
    %c0_9 = arith.constant 0 : index
    %16 = vector.load %arg0[%c0_8, %c1, %c0_9] : memref<2x4x256xf32, #tpu.memory_space<vmem>>, vector<2x1x256xf32>
    %17 = vector.shape_cast %16 : vector<2x1x256xf32> to vector<2x256xf32>
    %c1_10 = arith.constant 1 : index
    %c0_11 = arith.constant 0 : index
    %c0_12 = arith.constant 0 : index
    %18 = vector.load %arg1[%c1_10, %c0_11, %c0_12] : memref<4x32x256xf32, #tpu.memory_space<vmem>>, vector<1x32x256xf32>
    %19 = vector.shape_cast %18 : vector<1x32x256xf32> to vector<32x256xf32>
    %cst_13 = arith.constant dense<0.000000e+00> : vector<2x32xf32>
    %20 = tpu.matmul %17, %19, %cst_13 {dimension_numbers = #tpu.dot_dimension_numbers<[1], [1], [0], [0], [0, 0, 1, 0], [], []>} : vector<2x256xf32>, vector<32x256xf32>, vector<2x32xf32> -> vector<2x32xf32>
    %21 = vector.extract_strided_slice %0 {offsets = [1, 0], sizes = [1, 32], strides = [1, 1]} : vector<4x32xf32> to vector<1x32xf32>
    %22 = vector.shape_cast %21 : vector<1x32xf32> to vector<32xf32>
    %23 = vector.shape_cast %22 : vector<32xf32> to vector<1x32xf32>
    %24 = vector.broadcast %23 : vector<1x32xf32> to vector<2x32xf32>
    %25 = arith.addf %20, %24 : vector<2x32xf32>
    %26 = arith.negf %25 : vector<2x32xf32>
    %27 = math.exp %26 : vector<2x32xf32>
    %cst_14 = arith.constant 1.000000e+00 : f32
    %28 = vector.broadcast %cst_14 : f32 to vector<2x32xf32>
    %29 = arith.addf %28, %27 : vector<2x32xf32>
    %30 = arith.divf %28, %29 : vector<2x32xf32>
    %c0_15 = arith.constant 0 : index
    %c2 = arith.constant 2 : index
    %c0_16 = arith.constant 0 : index
    %31 = vector.load %arg0[%c0_15, %c2, %c0_16] : memref<2x4x256xf32, #tpu.memory_space<vmem>>, vector<2x1x256xf32>
    %32 = vector.shape_cast %31 : vector<2x1x256xf32> to vector<2x256xf32>
    %c2_17 = arith.constant 2 : index
    %c0_18 = arith.constant 0 : index
    %c0_19 = arith.constant 0 : index
    %33 = vector.load %arg1[%c2_17, %c0_18, %c0_19] : memref<4x32x256xf32, #tpu.memory_space<vmem>>, vector<1x32x256xf32>
    %34 = vector.shape_cast %33 : vector<1x32x256xf32> to vector<32x256xf32>
    %cst_20 = arith.constant dense<0.000000e+00> : vector<2x32xf32>
    %35 = tpu.matmul %32, %34, %cst_20 {dimension_numbers = #tpu.dot_dimension_numbers<[1], [1], [0], [0], [0, 0, 1, 0], [], []>} : vector<2x256xf32>, vector<32x256xf32>, vector<2x32xf32> -> vector<2x32xf32>
    %36 = vector.extract_strided_slice %0 {offsets = [2, 0], sizes = [1, 32], strides = [1, 1]} : vector<4x32xf32> to vector<1x32xf32>
    %37 = vector.shape_cast %36 : vector<1x32xf32> to vector<32xf32>
    %38 = vector.shape_cast %37 : vector<32xf32> to vector<1x32xf32>
    %39 = vector.broadcast %38 : vector<1x32xf32> to vector<2x32xf32>
    %40 = arith.addf %35, %39 : vector<2x32xf32>
    %41 = arith.negf %40 : vector<2x32xf32>
    %42 = math.exp %41 : vector<2x32xf32>
    %cst_21 = arith.constant 1.000000e+00 : f32
    %43 = vector.broadcast %cst_21 : f32 to vector<2x32xf32>
    %44 = arith.addf %43, %42 : vector<2x32xf32>
    %45 = arith.divf %43, %44 : vector<2x32xf32>
    %c0_22 = arith.constant 0 : index
    %c3 = arith.constant 3 : index
    %c0_23 = arith.constant 0 : index
    %46 = vector.load %arg0[%c0_22, %c3, %c0_23] : memref<2x4x256xf32, #tpu.memory_space<vmem>>, vector<2x1x256xf32>
    %47 = vector.shape_cast %46 : vector<2x1x256xf32> to vector<2x256xf32>
    %c3_24 = arith.constant 3 : index
    %c0_25 = arith.constant 0 : index
    %c0_26 = arith.constant 0 : index
    %48 = vector.load %arg1[%c3_24, %c0_25, %c0_26] : memref<4x32x256xf32, #tpu.memory_space<vmem>>, vector<1x32x256xf32>
    %49 = vector.shape_cast %48 : vector<1x32x256xf32> to vector<32x256xf32>
    %cst_27 = arith.constant dense<0.000000e+00> : vector<2x32xf32>
    %50 = tpu.matmul %47, %49, %cst_27 {dimension_numbers = #tpu.dot_dimension_numbers<[1], [1], [0], [0], [0, 0, 1, 0], [], []>} : vector<2x256xf32>, vector<32x256xf32>, vector<2x32xf32> -> vector<2x32xf32>
    %51 = vector.extract_strided_slice %0 {offsets = [3, 0], sizes = [1, 32], strides = [1, 1]} : vector<4x32xf32> to vector<1x32xf32>
    %52 = vector.shape_cast %51 : vector<1x32xf32> to vector<32xf32>
    %53 = vector.shape_cast %52 : vector<32xf32> to vector<1x32xf32>
    %54 = vector.broadcast %53 : vector<1x32xf32> to vector<2x32xf32>
    %55 = arith.addf %50, %54 : vector<2x32xf32>
    %56 = arith.negf %55 : vector<2x32xf32>
    %57 = math.exp %56 : vector<2x32xf32>
    %cst_28 = arith.constant 1.000000e+00 : f32
    %58 = vector.broadcast %cst_28 : f32 to vector<2x32xf32>
    %59 = arith.addf %58, %57 : vector<2x32xf32>
    %60 = arith.divf %58, %59 : vector<2x32xf32>
    %61 = tpu.concatenate %15, %30, %45, %60 in 1 : vector<2x32xf32>, vector<2x32xf32>, vector<2x32xf32>, vector<2x32xf32> -> vector<2x128xf32>
    %c0_29 = arith.constant 0 : index
    %c0_30 = arith.constant 0 : index
    %62 = vector.load %arg3[%c0_29, %c0_30] : memref<2x128xf32, #tpu.memory_space<vmem>>, vector<2x128xf32>
    tpu.vector_store %arg3[%c0_29, %c0_30], %61 {strides = array<i32>} : memref<2x128xf32, #tpu.memory_space<vmem>>, vector<2x128xf32>,
    return
  }
}

</mosaic_0001>

<llo_original>
// kernel: channel_wise_fc2d.1
$region0: #{channel_wise_fc2d.1}
  #allocation0 [shape = 'u32[]', space=smem, size = 0x4, offset = 0x4, fixed_abs, tag = 'smem constant byte address 0x4 - core index']
  #allocation1 [shape = 'u32[144,128]{1,0:T(1,128)}', space=vmem, size = 0x12000, scoped, tag = 'internal scratch']
  %s0 = inlined_call_operand.vmem [shape: f32[2,4,256], index: 0, kind: input, shape index: {}]
  %s1 = inlined_call_operand.hbm [shape: f32[4,32,256], index: 1, kind: input, shape index: {}]
  %s2 = inlined_call_operand.vmem [shape: f32[4,32], index: 2, kind: input, shape index: {}]
  %s3 = inlined_call_operand.vmem [shape: f32[2,128], index: 3, kind: output, shape index: {}]
  %s4 = sld [smem:[#allocation0]]
  $region26: #{channel_wise_fc2d.1} parent=0
    _
  %s6 = ssub.s32 1, %s4
  %s7 = scalar_select 0, %s6, %s4
  $region1: #{channel_wise_fc2d.1} parent=0
    #allocation2 [shape = 'u8[131072]{0}', space=vmem, size = 0x20000, scoped, tag = 'input window, operand 1, single buffered']
    #allocation3 [shape = 's32[1]{0}', space=sflag, size = 0x4, scoped, tag = 'scoped memory for channel_wise_fc2d.1']
    %8 = vsyncpa [#allocation3], 0
    // Predicated region
    $region2: #{channel_wise_fc2d.1} parent=1 // pred_check
      _
    $region3: #{channel_wise_fc2d.1} parent=1 // pred_check_branch
      %10 = sbr.rel (0) target = $region5
    $region4: #{channel_wise_fc2d.1} parent=1 // pred_region
      _
    $region5: #{channel_wise_fc2d.1} parent=1 // pred_fallthru
      _
    // Predicated region
    $region6: #{channel_wise_fc2d.1} parent=1 // pred_check
      _
    $region7: #{channel_wise_fc2d.1} parent=1 // pred_check_branch
      %12 = sbr.rel (0) target = $region9
    $region8: #{channel_wise_fc2d.1} parent=1 // pred_region
      %s14 = ssub.s32 4096, 4096
      %15 = vsyncadd [#allocation3], %s14
      %s16 = sshll.u32 [#allocation2], 4
      %s17 = int_to_ptr.vmem [resolvable:$true] %s16
      %22 = dma.hbm_to_vmem [thread:$0]  %s1, 4096, %s17, [#allocation3], 256, 256, 16
    $region9: #{channel_wise_fc2d.1} parent=1 // pred_fallthru
      _
    // Predicated region
    $region10: #{channel_wise_fc2d.1} parent=1 // pred_check
      _
    $region11: #{channel_wise_fc2d.1} parent=1 // pred_check_branch
      %24 = sbr.rel (0) target = $region13
    $region12: #{channel_wise_fc2d.1} parent=1 // pred_region
      _
    $region13: #{channel_wise_fc2d.1} parent=1 // pred_fallthru
      _
    // Predicated region
    $region14: #{channel_wise_fc2d.1} parent=1 // pred_check
      _
    $region15: #{channel_wise_fc2d.1} parent=1 // pred_check_branch
      %26 = sbr.rel (0) target = $region17
    $region16: #{channel_wise_fc2d.1} parent=1 // pred_region
      %27 = dma.done [#allocation3], 4096
    $region17: #{channel_wise_fc2d.1} parent=1 // pred_fallthru
      _
    %v28 = vld [vmem:[%s2] sm:$0xf]
    %v29 = vld [vmem:[%s0] ss:$4 sm:$0x3]
    %s30 = scalar_lea.vmem %s0, 8
    %v31 = vld [vmem:[%s30] ss:$4 sm:$0x3]
    %v32 = vld [vmem:[#allocation2] sm:$0xff]
    %v33 = vld [vmem:[#allocation2 + $0x8] sm:$0xff]
    %v34 = vld [vmem:[#allocation2 + $0x10] sm:$0xff]
    %v35 = vld [vmem:[#allocation2 + $0x18] sm:$0xff]
    %v36 = vld [vmem:[#allocation2 + $0x20] sm:$0xff]
    %v37 = vld [vmem:[#allocation2 + $0x28] sm:$0xff]
    %v38 = vld [vmem:[#allocation2 + $0x30] sm:$0xff]
    %v39 = vld [vmem:[#allocation2 + $0x38] sm:$0xff]
    %v40 = vlaneseq
    %v41 = vshrl.u32 %v40, 7
    %v42 = vsub.s32 0, %v41
    %v43 = vrot.slane %v28, %v42
    %v46 = vcombine.low %v29, %v31
    %v48 = vunpack.c.l.s4 1966171168
    %v49 = vunpack.c.0.s8 %v48
    %v50 = vlaneseq
    %v51 = vshrl.u32 %v50, 7
    %v52 = vsub.s32 %v49, %v51
    %v53 = vrot.slane %v46, %v52
    %v54 = vcombine.high %v53, %v53
    %v56 = vunpack.c.l.s4 1966171168
    %v57 = vunpack.c.0.s8 %v56
    %v58 = vlaneseq
    %v59 = vshrl.u32 %v58, 7
    %v60 = vsub.s32 %v57, %v59
    %v61 = vrot.slane %v53, %v60
    %v63 = vunpack.c.l.s4 1966171168
    %v64 = vunpack.c.0.s8 %v63
    %v65 = vlaneseq
    %v66 = vshrl.u32 %v65, 7
    %v67 = vsub.s32 %v64, %v66
    %v68 = vrot.slane %v54, %v67
    %71 = vmatprep.subr.mxu0 0.0
    %72 = vmatpush1.xpose.msra.mxu0 0.0
    %73 = vmatprep.subr.mxu0 0.0
    %74 = vmatpush1.xpose.msra.mxu0 0.0
    %75 = vmatprep.subr.mxu0 0.0
    %76 = vmatpush1.xpose.msra.mxu0 0.0
    %77 = vmatprep.subr.mxu0 0.0
    %78 = vmatpush1.xpose.msra.mxu0 0.0
    %79 = vmatprep.subr.mxu0 0.0
    %80 = vmatpush1.xpose.msra.mxu0 0.0
    %81 = vmatprep.subr.mxu0 0.0
    %82 = vmatpush1.xpose.msra.mxu0 0.0
    %83 = vmatprep.subr.mxu0 0.0
    %84 = vmatpush1.xpose.msra.mxu0 0.0
    %85 = vmatprep.subr.mxu0 0.0
    %86 = vmatpush1.xpose.msra.mxu0 0.0
    %87 = vmatprep.subr.mxu0 0.0
    %88 = vmatpush1.xpose.msra.mxu0 0.0
    %89 = vmatprep.subr.mxu0 0.0
    %90 = vmatpush1.xpose.msra.mxu0 0.0
    %91 = vmatprep.subr.mxu0 0.0
    %92 = vmatpush1.xpose.msra.mxu0 0.0
    %93 = vmatprep.subr.mxu0 0.0
    %94 = vmatpush1.xpose.msra.mxu0 0.0
    %95 = vmatprep.subr.mxu0 %v39
    %96 = vmatpush1.xpose.msra.mxu0 %v38
    %97 = vmatprep.subr.mxu0 %v37
    %98 = vmatpush1.xpose.msra.mxu0 %v36
    %99 = vmatprep.subr.mxu0 %v35
    %100 = vmatpush1.xpose.msra.mxu0 %v34
    %101 = vmatprep.subr.mxu0 %v33
    %102 = vmatpush1.xpose.msra.mxu0 %v32
    %103 = vmatprep.subr.mxu0 0.0
    %104 = vmatpush2.xpose.msra.mxu0 0.0
    %105 = vmatprep.subr.mxu0 0.0
    %106 = vmatpush2.xpose.msra.mxu0 0.0
    %107 = vmatprep.subr.mxu0 0.0
    %108 = vmatpush2.xpose.msra.mxu0 0.0
    %109 = vmatprep.subr.mxu0 0.0
    %110 = vmatpush2.xpose.msra.mxu0 0.0
    %111 = vmatprep.subr.mxu0 0.0
    %112 = vmatpush2.xpose.msra.mxu0 0.0
    %113 = vmatprep.subr.mxu0 0.0
    %114 = vmatpush2.xpose.msra.mxu0 0.0
    %115 = vmatprep.subr.mxu0 0.0
    %116 = vmatpush2.xpose.msra.mxu0 0.0
    %117 = vmatprep.subr.mxu0 0.0
    %118 = vmatpush2.xpose.msra.mxu0 0.0
    %119 = vmatprep.subr.mxu0 0.0
    %120 = vmatpush2.xpose.msra.mxu0 0.0
    %121 = vmatprep.subr.mxu0 0.0
    %122 = vmatpush2.xpose.msra.mxu0 0.0
    %123 = vmatprep.subr.mxu0 0.0
    %124 = vmatpush2.xpose.msra.mxu0 0.0
    %125 = vmatprep.subr.mxu0 0.0
    %126 = vmatpush2.xpose.msra.mxu0 0.0
    %127 = vmatprep.subr.mxu0 0.0
    %128 = vmatpush2.xpose.msra.mxu0 0.0
    %129 = vmatprep.subr.mxu0 0.0
    %130 = vmatpush2.xpose.msra.mxu0 0.0
    %131 = vmatprep.subr.mxu0 0.0
    %132 = vmatpush2.xpose.msra.mxu0 0.0
    %133 = vmatprep.subr.mxu0 0.0
    %134 = vmatpush2.xpose.msra.mxu0 0.0
    %135 = vmatprep.mubr.f32.mxu0 %v68
    %136 = vmatmul.mubr.f32.gmra.mxu0 %v61
    %v137 = vpop.f32.mrf.mxu0
    %v138 = vadd.f32 %v43, %v137
    %v139 = vpop.f32.mrf.mxu0
    %140 = vdwg.mxu0
    %v141 = vxor.u32 %v138, 2147483648
    %v142 = vmul.f32 %v141, 1.442695
    %v143 = vpow.pop %v142
    %v144 = vadd.f32 %v143, 1.0
    %v145 = vrcp.pop %v144
    %v146 = vmul.f32 1.0, %v145
    %s147 = scalar_lea.vmem %s0, 1
    %v148 = vld [vmem:[%s147] ss:$4 sm:$0x3]
    %s149 = scalar_lea.vmem %s0, 9
    %v150 = vld [vmem:[%s149] ss:$4 sm:$0x3]
    %s151 = scalar_lea.vmem [#allocation2], 64
    %v152 = vld [vmem:[%s151] sm:$0xff]
    %v153 = vld [vmem:[%s151 + $0x8] sm:$0xff]
    %v154 = vld [vmem:[%s151 + $0x10] sm:$0xff]
    %v155 = vld [vmem:[%s151 + $0x18] sm:$0xff]
    %v156 = vld [vmem:[%s151 + $0x20] sm:$0xff]
    %v157 = vld [vmem:[%s151 + $0x28] sm:$0xff]
    %v158 = vld [vmem:[%s151 + $0x30] sm:$0xff]
    %v159 = vld [vmem:[%s151 + $0x38] sm:$0xff]
    %v160 = vlaneseq
    %v161 = vshrl.u32 %v160, 7
    %v162 = vsub.s32 1, %v161
    %v163 = vrot.slane %v28, %v162
    %v166 = vcombine.low %v148, %v150
    %v168 = vunpack.c.l.s4 1966171168
    %v169 = vunpack.c.0.s8 %v168
    %v170 = vlaneseq
    %v171 = vshrl.u32 %v170, 7
    %v172 = vsub.s32 %v169, %v171
    %v173 = vrot.slane %v166, %v172
    %v174 = vcombine.high %v173, %v173
    %v176 = vunpack.c.l.s4 1966171168
    %v177 = vunpack.c.0.s8 %v176
    %v178 = vlaneseq
    %v179 = vshrl.u32 %v178, 7
    %v180 = vsub.s32 %v177, %v179
    %v181 = vrot.slane %v173, %v180
    %v183 = vunpack.c.l.s4 1966171168
    %v184 = vunpack.c.0.s8 %v183
    %v185 = vlaneseq
    %v186 = vshrl.u32 %v185, 7
    %v187 = vsub.s32 %v184, %v186
    %v188 = vrot.slane %v174, %v187
    %191 = vmatprep.subr.mxu0 0.0
    %192 = vmatpush1.xpose.msra.mxu0 0.0
    %193 = vmatprep.subr.mxu0 0.0
    %194 = vmatpush1.xpose.msra.mxu0 0.0
    %195 = vmatprep.subr.mxu0 0.0
    %196 = vmatpush1.xpose.msra.mxu0 0.0
    %197 = vmatprep.subr.mxu0 0.0
    %198 = vmatpush1.xpose.msra.mxu0 0.0
    %199 = vmatprep.subr.mxu0 0.0
    %200 = vmatpush1.xpose.msra.mxu0 0.0
    %201 = vmatprep.subr.mxu0 0.0
    %202 = vmatpush1.xpose.msra.mxu0 0.0
    %203 = vmatprep.subr.mxu0 0.0
    %204 = vmatpush1.xpose.msra.mxu0 0.0
    %205 = vmatprep.subr.mxu0 0.0
    %206 = vmatpush1.xpose.msra.mxu0 0.0
    %207 = vmatprep.subr.mxu0 0.0
    %208 = vmatpush1.xpose.msra.mxu0 0.0
    %209 = vmatprep.subr.mxu0 0.0
    %210 = vmatpush1.xpose.msra.mxu0 0.0
    %211 = vmatprep.subr.mxu0 0.0
    %212 = vmatpush1.xpose.msra.mxu0 0.0
    %213 = vmatprep.subr.mxu0 0.0
    %214 = vmatpush1.xpose.msra.mxu0 0.0
    %215 = vmatprep.subr.mxu0 %v159
    %216 = vmatpush1.xpose.msra.mxu0 %v158
    %217 = vmatprep.subr.mxu0 %v157
    %218 = vmatpush1.xpose.msra.mxu0 %v156
    %219 = vmatprep.subr.mxu0 %v155
    %220 = vmatpush1.xpose.msra.mxu0 %v154
    %221 = vmatprep.subr.mxu0 %v153
    %222 = vmatpush1.xpose.msra.mxu0 %v152
    %223 = vmatprep.subr.mxu0 0.0
    %224 = vmatpush2.xpose.msra.mxu0 0.0
    %225 = vmatprep.subr.mxu0 0.0
    %226 = vmatpush2.xpose.msra.mxu0 0.0
    %227 = vmatprep.subr.mxu0 0.0
    %228 = vmatpush2.xpose.msra.mxu0 0.0
    %229 = vmatprep.subr.mxu0 0.0
    %230 = vmatpush2.xpose.msra.mxu0 0.0
    %231 = vmatprep.subr.mxu0 0.0
    %232 = vmatpush2.xpose.msra.mxu0 0.0
    %233 = vmatprep.subr.mxu0 0.0
    %234 = vmatpush2.xpose.msra.mxu0 0.0
    %235 = vmatprep.subr.mxu0 0.0
    %236 = vmatpush2.xpose.msra.mxu0 0.0
    %237 = vmatprep.subr.mxu0 0.0
    %238 = vmatpush2.xpose.msra.mxu0 0.0
    %239 = vmatprep.subr.mxu0 0.0
    %240 = vmatpush2.xpose.msra.mxu0 0.0
    %241 = vmatprep.subr.mxu0 0.0
    %242 = vmatpush2.xpose.msra.mxu0 0.0
    %243 = vmatprep.subr.mxu0 0.0
    %244 = vmatpush2.xpose.msra.mxu0 0.0
    %245 = vmatprep.subr.mxu0 0.0
    %246 = vmatpush2.xpose.msra.mxu0 0.0
    %247 = vmatprep.subr.mxu0 0.0
    %248 = vmatpush2.xpose.msra.mxu0 0.0
    %249 = vmatprep.subr.mxu0 0.0
    %250 = vmatpush2.xpose.msra.mxu0 0.0
    %251 = vmatprep.subr.mxu0 0.0
    %252 = vmatpush2.xpose.msra.mxu0 0.0
    %253 = vmatprep.subr.mxu0 0.0
    %254 = vmatpush2.xpose.msra.mxu0 0.0
    %255 = vmatprep.mubr.f32.mxu0 %v188
    %256 = vmatmul.mubr.f32.gmra.mxu0 %v181
    %v257 = vpop.f32.mrf.mxu0
    %v258 = vadd.f32 %v163, %v257
    %v259 = vpop.f32.mrf.mxu0
    %260 = vdwg.mxu0
    %v261 = vxor.u32 %v258, 2147483648
    %v262 = vmul.f32 %v261, 1.442695
    %v263 = vpow.pop %v262
    %v264 = vadd.f32 %v263, 1.0
    %v265 = vrcp.pop %v264
    %v266 = vmul.f32 1.0, %v265
    %s267 = scalar_lea.vmem %s0, 2
    %v268 = vld [vmem:[%s267] ss:$4 sm:$0x3]
    %s269 = scalar_lea.vmem %s0, 10
    %v270 = vld [vmem:[%s269] ss:$4 sm:$0x3]
    %s271 = scalar_lea.vmem [#allocation2], 128
    %v272 = vld [vmem:[%s271] sm:$0xff]
    %v273 = vld [vmem:[%s271 + $0x8] sm:$0xff]
    %v274 = vld [vmem:[%s271 + $0x10] sm:$0xff]
    %v275 = vld [vmem:[%s271 + $0x18] sm:$0xff]
    %v276 = vld [vmem:[%s271 + $0x20] sm:$0xff]
    %v277 = vld [vmem:[%s271 + $0x28] sm:$0xff]
    %v278 = vld [vmem:[%s271 + $0x30] sm:$0xff]
    %v279 = vld [vmem:[%s271 + $0x38] sm:$0xff]
    %v280 = vlaneseq
    %v281 = vshrl.u32 %v280, 7
    %v282 = vsub.s32 2, %v281
    %v283 = vrot.slane %v28, %v282
    %v286 = vcombine.low %v268, %v270
    %v288 = vunpack.c.l.s4 1966171168
    %v289 = vunpack.c.0.s8 %v288
    %v290 = vlaneseq
    %v291 = vshrl.u32 %v290, 7
    %v292 = vsub.s32 %v289, %v291
    %v293 = vrot.slane %v286, %v292
    %v294 = vcombine.high %v293, %v293
    %v296 = vunpack.c.l.s4 1966171168
    %v297 = vunpack.c.0.s8 %v296
    %v298 = vlaneseq
    %v299 = vshrl.u32 %v298, 7
    %v300 = vsub.s32 %v297, %v299
    %v301 = vrot.slane %v293, %v300
    %v303 = vunpack.c.l.s4 1966171168
    %v304 = vunpack.c.0.s8 %v303
    %v305 = vlaneseq
    %v306 = vshrl.u32 %v305, 7
    %v307 = vsub.s32 %v304, %v306
    %v308 = vrot.slane %v294, %v307
    %311 = vmatprep.subr.mxu0 0.0
    %312 = vmatpush1.xpose.msra.mxu0 0.0
    %313 = vmatprep.subr.mxu0 0.0
    %314 = vmatpush1.xpose.msra.mxu0 0.0
    %315 = vmatprep.subr.mxu0 0.0
    %316 = vmatpush1.xpose.msra.mxu0 0.0
    %317 = vmatprep.subr.mxu0 0.0
    %318 = vmatpush1.xpose.msra.mxu0 0.0
    %319 = vmatprep.subr.mxu0 0.0
    %320 = vmatpush1.xpose.msra.mxu0 0.0
    %321 = vmatprep.subr.mxu0 0.0
    %322 = vmatpush1.xpose.msra.mxu0 0.0
    %323 = vmatprep.subr.mxu0 0.0
    %324 = vmatpush1.xpose.msra.mxu0 0.0
    %325 = vmatprep.subr.mxu0 0.0
    %326 = vmatpush1.xpose.msra.mxu0 0.0
    %327 = vmatprep.subr.mxu0 0.0
    %328 = vmatpush1.xpose.msra.mxu0 0.0
    %329 = vmatprep.subr.mxu0 0.0
    %330 = vmatpush1.xpose.msra.mxu0 0.0
    %331 = vmatprep.subr.mxu0 0.0
    %332 = vmatpush1.xpose.msra.mxu0 0.0
    %333 = vmatprep.subr.mxu0 0.0
    %334 = vmatpush1.xpose.msra.mxu0 0.0
    %335 = vmatprep.subr.mxu0 %v279
    %336 = vmatpush1.xpose.msra.mxu0 %v278
    %337 = vmatprep.subr.mxu0 %v277
    %338 = vmatpush1.xpose.msra.mxu0 %v276
    %339 = vmatprep.subr.mxu0 %v275
    %340 = vmatpush1.xpose.msra.mxu0 %v274
    %341 = vmatprep.subr.mxu0 %v273
    %342 = vmatpush1.xpose.msra.mxu0 %v272
    %343 = vmatprep.subr.mxu0 0.0
    %344 = vmatpush2.xpose.msra.mxu0 0.0
    %345 = vmatprep.subr.mxu0 0.0
    %346 = vmatpush2.xpose.msra.mxu0 0.0
    %347 = vmatprep.subr.mxu0 0.0
    %348 = vmatpush2.xpose.msra.mxu0 0.0
    %349 = vmatprep.subr.mxu0 0.0
    %350 = vmatpush2.xpose.msra.mxu0 0.0
    %351 = vmatprep.subr.mxu0 0.0
    %352 = vmatpush2.xpose.msra.mxu0 0.0
    %353 = vmatprep.subr.mxu0 0.0
    %354 = vmatpush2.xpose.msra.mxu0 0.0
    %355 = vmatprep.subr.mxu0 0.0
    %356 = vmatpush2.xpose.msra.mxu0 0.0
    %357 = vmatprep.subr.mxu0 0.0
    %358 = vmatpush2.xpose.msra.mxu0 0.0
    %359 = vmatprep.subr.mxu0 0.0
    %360 = vmatpush2.xpose.msra.mxu0 0.0
    %361 = vmatprep.subr.mxu0 0.0
    %362 = vmatpush2.xpose.msra.mxu0 0.0
    %363 = vmatprep.subr.mxu0 0.0
    %364 = vmatpush2.xpose.msra.mxu0 0.0
    %365 = vmatprep.subr.mxu0 0.0
    %366 = vmatpush2.xpose.msra.mxu0 0.0
    %367 = vmatprep.subr.mxu0 0.0
    %368 = vmatpush2.xpose.msra.mxu0 0.0
    %369 = vmatprep.subr.mxu0 0.0
    %370 = vmatpush2.xpose.msra.mxu0 0.0
    %371 = vmatprep.subr.mxu0 0.0
    %372 = vmatpush2.xpose.msra.mxu0 0.0
    %373 = vmatprep.subr.mxu0 0.0
    %374 = vmatpush2.xpose.msra.mxu0 0.0
    %375 = vmatprep.mubr.f32.mxu0 %v308
    %376 = vmatmul.mubr.f32.gmra.mxu0 %v301
    %v377 = vpop.f32.mrf.mxu0
    %v378 = vadd.f32 %v283, %v377
    %v379 = vpop.f32.mrf.mxu0
    %380 = vdwg.mxu0
    %v381 = vxor.u32 %v378, 2147483648
    %v382 = vmul.f32 %v381, 1.442695
    %v383 = vpow.pop %v382
    %v384 = vadd.f32 %v383, 1.0
    %v385 = vrcp.pop %v384
    %v386 = vmul.f32 1.0, %v385
    %s387 = scalar_lea.vmem %s0, 3
    %v388 = vld [vmem:[%s387] ss:$4 sm:$0x3]
    %s389 = scalar_lea.vmem %s0, 11
    %v390 = vld [vmem:[%s389] ss:$4 sm:$0x3]
    %s391 = scalar_lea.vmem [#allocation2], 192
    %v392 = vld [vmem:[%s391] sm:$0xff]
    %v393 = vld [vmem:[%s391 + $0x8] sm:$0xff]
    %v394 = vld [vmem:[%s391 + $0x10] sm:$0xff]
    %v395 = vld [vmem:[%s391 + $0x18] sm:$0xff]
    %v396 = vld [vmem:[%s391 + $0x20] sm:$0xff]
    %v397 = vld [vmem:[%s391 + $0x28] sm:$0xff]
    %v398 = vld [vmem:[%s391 + $0x30] sm:$0xff]
    %v399 = vld [vmem:[%s391 + $0x38] sm:$0xff]
    %v400 = vlaneseq
    %v401 = vshrl.u32 %v400, 7
    %v402 = vsub.s32 3, %v401
    %v403 = vrot.slane %v28, %v402
    %v406 = vcombine.low %v388, %v390
    %v408 = vunpack.c.l.s4 1966171168
    %v409 = vunpack.c.0.s8 %v408
    %v410 = vlaneseq
    %v411 = vshrl.u32 %v410, 7
    %v412 = vsub.s32 %v409, %v411
    %v413 = vrot.slane %v406, %v412
    %v414 = vcombine.high %v413, %v413
    %v416 = vunpack.c.l.s4 1966171168
    %v417 = vunpack.c.0.s8 %v416
    %v418 = vlaneseq
    %v419 = vshrl.u32 %v418, 7
    %v420 = vsub.s32 %v417, %v419
    %v421 = vrot.slane %v413, %v420
    %v423 = vunpack.c.l.s4 1966171168
    %v424 = vunpack.c.0.s8 %v423
    %v425 = vlaneseq
    %v426 = vshrl.u32 %v425, 7
    %v427 = vsub.s32 %v424, %v426
    %v428 = vrot.slane %v414, %v427
    %431 = vmatprep.subr.mxu0 0.0
    %432 = vmatpush1.xpose.msra.mxu0 0.0
    %433 = vmatprep.subr.mxu0 0.0
    %434 = vmatpush1.xpose.msra.mxu0 0.0
    %435 = vmatprep.subr.mxu0 0.0
    %436 = vmatpush1.xpose.msra.mxu0 0.0
    %437 = vmatprep.subr.mxu0 0.0
    %438 = vmatpush1.xpose.msra.mxu0 0.0
    %439 = vmatprep.subr.mxu0 0.0
    %440 = vmatpush1.xpose.msra.mxu0 0.0
    %441 = vmatprep.subr.mxu0 0.0
    %442 = vmatpush1.xpose.msra.mxu0 0.0
    %443 = vmatprep.subr.mxu0 0.0
    %444 = vmatpush1.xpose.msra.mxu0 0.0
    %445 = vmatprep.subr.mxu0 0.0
    %446 = vmatpush1.xpose.msra.mxu0 0.0
    %447 = vmatprep.subr.mxu0 0.0
    %448 = vmatpush1.xpose.msra.mxu0 0.0
    %449 = vmatprep.subr.mxu0 0.0
    %450 = vmatpush1.xpose.msra.mxu0 0.0
    %451 = vmatprep.subr.mxu0 0.0
    %452 = vmatpush1.xpose.msra.mxu0 0.0
    %453 = vmatprep.subr.mxu0 0.0
    %454 = vmatpush1.xpose.msra.mxu0 0.0
    %455 = vmatprep.subr.mxu0 %v399
    %456 = vmatpush1.xpose.msra.mxu0 %v398
    %457 = vmatprep.subr.mxu0 %v397
    %458 = vmatpush1.xpose.msra.mxu0 %v396
    %459 = vmatprep.subr.mxu0 %v395
    %460 = vmatpush1.xpose.msra.mxu0 %v394
    %461 = vmatprep.subr.mxu0 %v393
    %462 = vmatpush1.xpose.msra.mxu0 %v392
    %463 = vmatprep.subr.mxu0 0.0
    %464 = vmatpush2.xpose.msra.mxu0 0.0
    %465 = vmatprep.subr.mxu0 0.0
    %466 = vmatpush2.xpose.msra.mxu0 0.0
    %467 = vmatprep.subr.mxu0 0.0
    %468 = vmatpush2.xpose.msra.mxu0 0.0
    %469 = vmatprep.subr.mxu0 0.0
    %470 = vmatpush2.xpose.msra.mxu0 0.0
    %471 = vmatprep.subr.mxu0 0.0
    %472 = vmatpush2.xpose.msra.mxu0 0.0
    %473 = vmatprep.subr.mxu0 0.0
    %474 = vmatpush2.xpose.msra.mxu0 0.0
    %475 = vmatprep.subr.mxu0 0.0
    %476 = vmatpush2.xpose.msra.mxu0 0.0
    %477 = vmatprep.subr.mxu0 0.0
    %478 = vmatpush2.xpose.msra.mxu0 0.0
    %479 = vmatprep.subr.mxu0 0.0
    %480 = vmatpush2.xpose.msra.mxu0 0.0
    %481 = vmatprep.subr.mxu0 0.0
    %482 = vmatpush2.xpose.msra.mxu0 0.0
    %483 = vmatprep.subr.mxu0 0.0
    %484 = vmatpush2.xpose.msra.mxu0 0.0
    %485 = vmatprep.subr.mxu0 0.0
    %486 = vmatpush2.xpose.msra.mxu0 0.0
    %487 = vmatprep.subr.mxu0 0.0
    %488 = vmatpush2.xpose.msra.mxu0 0.0
    %489 = vmatprep.subr.mxu0 0.0
    %490 = vmatpush2.xpose.msra.mxu0 0.0
    %491 = vmatprep.subr.mxu0 0.0
    %492 = vmatpush2.xpose.msra.mxu0 0.0
    %493 = vmatprep.subr.mxu0 0.0
    %494 = vmatpush2.xpose.msra.mxu0 0.0
    %495 = vmatprep.mubr.f32.mxu0 %v428
    %496 = vmatmul.mubr.f32.gmra.mxu0 %v421
    %v497 = vpop.f32.mrf.mxu0
    %v498 = vadd.f32 %v403, %v497
    %v499 = vpop.f32.mrf.mxu0
    %500 = vdwg.mxu0
    %v501 = vxor.u32 %v498, 2147483648
    %v502 = vmul.f32 %v501, 1.442695
    %v503 = vpow.pop %v502
    %v504 = vadd.f32 %v503, 1.0
    %v505 = vrcp.pop %v504
    %v506 = vmul.f32 1.0, %v505
    %508 = vrot.lane.b32.xlu0 %v266, 32
    %v509 = vpop.permute.xlu0 %508
    %512 = vrot.lane.b32.xlu0 %v386, 64
    %v513 = vpop.permute.xlu0 %512
    %516 = vrot.lane.b32.xlu0 %v506, 96
    %v517 = vpop.permute.xlu0 %516
    %vm519 = vcmask 261120
    %v520 = vsel %vm519, %v146, %v509
    %vm521 = vcmask 523264
    %v522 = vsel %vm521, %v520, %v513
    %vm523 = vcmask 785408
    %v524 = vsel %vm523, %v522, %v517
    %525 = vst [vmem:[%s3] sm:$0x3] %v524
    // Predicated region
    $region18: #{channel_wise_fc2d.1} parent=1 // pred_check
      _
    $region19: #{channel_wise_fc2d.1} parent=1 // pred_check_branch
      %527 = sbr.rel (0) target = $region21
    $region20: #{channel_wise_fc2d.1} parent=1 // pred_region
      _
    $region21: #{channel_wise_fc2d.1} parent=1 // pred_fallthru
      _
    // Predicated region
    $region22: #{channel_wise_fc2d.1} parent=1 // pred_check
      _
    $region23: #{channel_wise_fc2d.1} parent=1 // pred_check_branch
      %529 = sbr.rel (0) target = $region25
    $region24: #{channel_wise_fc2d.1} parent=1 // pred_region
      _
    $region25: #{channel_wise_fc2d.1} parent=1 // pred_fallthru
      _
    %530 = vsyncpa [#allocation3], 1

</llo_original>
